<compile_context>
chip_gen: v6e
topology: v6e:2x2x1
jax: 0.10.0
libtpu: 0.0.40
codegen_flags: <defaults>
</compile_context>

<pallas_src>
import jax
import jax.numpy as jnp
from jax import lax
from jax.experimental import pallas as pl
from jax.experimental.pallas import tpu as pltpu


# ----------------------------------------------------------------------------------
# exact GELU (erf via Abramowitz & Stegun 7.1.26, |err| < 1.5e-7) built only from
# ops with guaranteed Mosaic lowerings (exp / mul / add / where).  Matches PyTorch's
# default nn.GELU() (erf form) to well below f32 matmul noise.
# ----------------------------------------------------------------------------------
def _erf_approx(x):
    p = 0.3275911
    a1, a2, a3, a4, a5 = (0.254829592, -0.284496736, 1.421413741,
                          -1.453152027, 1.061405429)
    sgn = jnp.where(x < 0.0, -1.0, 1.0)
    ax = jnp.abs(x)
    t = 1.0 / (1.0 + p * ax)
    poly = ((((a5 * t + a4) * t + a3) * t + a2) * t + a1) * t
    return sgn * (1.0 - poly * jnp.exp(-ax * ax))


def _gelu_exact(x):
    return 0.5 * x * (1.0 + _erf_approx(x * 0.7071067811865476))


# ----------------------------------------------------------------------------------
# Linear (fc1 / fc2): tiled matmul + bias, f32 accumulator in VMEM scratch.
# ----------------------------------------------------------------------------------
def _linear_kernel(x_ref, w_ref, b_ref, o_ref, acc_ref):
    @pl.when(pl.program_id(2) == 0)
    def _():
        acc_ref[...] = jnp.zeros_like(acc_ref)

    acc_ref[...] += jnp.dot(x_ref[...], w_ref[...],
                            preferred_element_type=jnp.float32)

    @pl.when(pl.program_id(2) == pl.num_programs(2) - 1)
    def _():
        o_ref[...] = (acc_ref[...] + b_ref[...].astype(jnp.float32)).astype(o_ref.dtype)


def _pick_tile(dim, pref):
    return pref if dim % pref == 0 else dim


def linear(x2d, w, b, *, tm=128, tn=128, tk=256):
    """x2d: (M, K), w: (K, N)  (PyTorch Linear weight (N, K) transposed), b: (N,)."""
    M, K = x2d.shape
    K2, N = w.shape
    assert K == K2
    tm, tn, tk = _pick_tile(M, tm), _pick_tile(N, tn), _pick_tile(K, tk)
    grid = (M // tm, N // tn, K // tk)
    return pl.pallas_call(
        _linear_kernel,
        out_shape=jax.ShapeDtypeStruct((M, N), x2d.dtype),
        grid_spec=pltpu.PrefetchScalarGridSpec(
            num_scalar_prefetch=0,
            grid=grid,
            in_specs=[
                pl.BlockSpec((tm, tk), lambda i, j, k: (i, k)),
                pl.BlockSpec((tk, tn), lambda i, j, k: (k, j)),
                pl.BlockSpec((1, tn), lambda i, j, k: (0, j)),
            ],
            out_specs=pl.BlockSpec((tm, tn), lambda i, j, k: (i, j)),
            scratch_shapes=[pltpu.VMEM((tm, tn), jnp.float32)],
        ),
        compiler_params=pltpu.CompilerParams(
            dimension_semantics=("parallel", "parallel", "arbitrary"),
            vmem_limit_bytes=32 * 1024 * 1024,
        ),
    )(x2d, w, b.reshape(1, -1))


# ----------------------------------------------------------------------------------
# Depthwise 3x3 conv (padding=1) + bias + GELU, fused.  NHWC, channel-tiled.
# ----------------------------------------------------------------------------------
def _dwconv_gelu_kernel(x_ref, w_ref, b_ref, o_ref, xp_ref):
    # x_ref : (1, H, W, Ct)   unpadded input tile (one batch, one channel tile)
    # w_ref : (9, Ct)         depthwise taps, row-major (dh*3 + dw)
    # b_ref : (1, Ct)         bias
    # o_ref : (1, H, W, Ct)
    # xp_ref: (1, H+2, W+2, Ct) VMEM scratch holding the zero-haloed tile
    _, H, W, C = o_ref.shape

    # Build the halo on-chip: zero only the 4 border strips, then write the interior.
    zrow = jnp.zeros((1, 1, W + 2, C), xp_ref.dtype)
    zcol = jnp.zeros((1, H + 2, 1, C), xp_ref.dtype)
    xp_ref[:, 0:1, :, :] = zrow
    xp_ref[:, H + 1:H + 2, :, :] = zrow
    xp_ref[:, :, 0:1, :] = zcol
    xp_ref[:, :, W + 1:W + 2, :] = zcol
    xp_ref[:, 1:H + 1, 1:W + 1, :] = x_ref[...]

    # Center tap initializes the accumulator (bias added once at the end).
    acc = x_ref[...].astype(jnp.float32) * w_ref[4, :].astype(jnp.float32)
    # Remaining 8 taps: shifted windows streamed straight from the padded VMEM ref.
    for dh in range(3):
        for dw in range(3):
            if dh == 1 and dw == 1:
                continue
            tap = w_ref[dh * 3 + dw, :].astype(jnp.float32)
            acc = acc + xp_ref[:, dh:dh + H, dw:dw + W, :].astype(jnp.float32) * tap

    acc = acc + b_ref[0, :].astype(jnp.float32)
    o_ref[...] = _gelu_exact(acc).astype(o_ref.dtype)


def dwconv_gelu(x_nhwc, w9c, bias):
    """x_nhwc: (B, H, W, C), w9c: (9, C), bias: (C,) -> GELU(dwconv3x3(x) + bias)."""
    B, H, W, C = x_nhwc.shape
    ct = 128 if C % 128 == 0 else C          # lane-dense channel tiles
    grid = (B, C // ct)
    return pl.pallas_call(
        _dwconv_gelu_kernel,
        out_shape=jax.ShapeDtypeStruct((B, H, W, C), x_nhwc.dtype),
        grid_spec=pltpu.PrefetchScalarGridSpec(
            num_scalar_prefetch=0,
            grid=grid,
            in_specs=[
                pl.BlockSpec((1, H, W, ct), lambda b, c: (b, 0, 0, c)),
                pl.BlockSpec((9, ct), lambda b, c: (0, c)),
                pl.BlockSpec((1, ct), lambda b, c: (0, c)),
            ],
            out_specs=pl.BlockSpec((1, H, W, ct), lambda b, c: (b, 0, 0, c)),
            scratch_shapes=[pltpu.VMEM((1, H + 2, W + 2, ct), x_nhwc.dtype)],
        ),
        compiler_params=pltpu.CompilerParams(
            dimension_semantics=("parallel", "parallel"),
            vmem_limit_bytes=32 * 1024 * 1024,
        ),
    )(x_nhwc, w9c, bias.reshape(1, -1))


# ----------------------------------------------------------------------------------
# Full Mlp forward (fc1 -> dwconv -> GELU -> dropout(p=0) -> fc2 -> dropout(p=0)).
# ----------------------------------------------------------------------------------
def mlp_forward(x, H, W, w1, b1, wdw, bdw, w2, b2):
    """x: (B, N, Cin) with N == H*W. Weights in JAX layout: w1 (Cin, Chid), w2 (Chid, Cout),
    wdw (3, 3, Chid) depthwise taps, biases 1-D."""
    B, N, Cin = x.shape
    assert N == H * W
    Chid = w1.shape[1]
    Cout = w2.shape[1]

    h = linear(x.reshape(B * N, Cin), w1, b1)                    # fc1
    h = h.reshape(B, H, W, Chid)                                 # (B,N,C) -> NHWC (pure reshape)
    h = dwconv_gelu(h, wdw.reshape(9, Chid), bdw)                # dwconv + bias + GELU fused
    h = h.reshape(B * N, Chid)
    # nn.Dropout(p=0.0) is an identity in the forward pass -> no-op.
    out = linear(h, w2, b2)                                      # fc2
    return out.reshape(B, N, Cout)


# ----------------------------------------------------------------------------------
# Pure-JAX reference (mirrors the PyTorch forward exactly).
# ----------------------------------------------------------------------------------
def mlp_reference(x, H, W, w1, b1, wdw, bdw, w2, b2):
    B, N, Cin = x.shape
    Chid = w1.shape[1]
    h = jnp.dot(x, w1) + b1
    h_nchw = jnp.transpose(h, (0, 2, 1)).reshape(B, Chid, H, W)
    wk = jnp.transpose(wdw, (2, 0, 1))[:, None, :, :]            # (C,1,3,3) OIHW
    y = lax.conv_general_dilated(
        h_nchw, wk, window_strides=(1, 1), padding=((1, 1), (1, 1)),
        feature_group_count=Chid,
        dimension_numbers=("NCHW", "OIHW", "NCHW"),
        precision=lax.Precision.HIGHEST)
    y = y + bdw[None, :, None, None]
    y = jnp.transpose(y.reshape(B, Chid, N), (0, 2, 1))
    y = jax.nn.gelu(y, approximate=False)                        # nn.GELU default (erf)
    out = jnp.dot(y, w2) + b2
    return out


if __name__ == "__main__":
    key = jax.random.PRNGKey(0)
    B, H, W = 2, 8, 8
    N = H * W
    Cin, Chid, Cout = 128, 256, 128                              # lane-dense feature dims

    k = jax.random.split(key, 7)
    x = jax.random.normal(k[0], (B, N, Cin), dtype=jnp.float32)

    # PyTorch-style uniform(-1/sqrt(fan_in), 1/sqrt(fan_in)) init.
    bnd1 = Cin ** -0.5
    w1 = jax.random.uniform(k[1], (Cin, Chid), jnp.float32, -bnd1, bnd1)   # fc1.weight.T
    b1 = jax.random.uniform(k[2], (Chid,), jnp.float32, -bnd1, bnd1)
    bnd_dw = (1 * 3 * 3) ** -0.5
    wdw = jax.random.uniform(k[3], (3, 3, Chid), jnp.float32, -bnd_dw, bnd_dw)
    bdw = jax.random.uniform(k[4], (Chid,), jnp.float32, -bnd_dw, bnd_dw)
    bnd2 = Chid ** -0.5
    w2 = jax.random.uniform(k[5], (Chid, Cout), jnp.float32, -bnd2, bnd2)  # fc2.weight.T
    b2 = jax.random.uniform(k[6], (Cout,), jnp.float32, -bnd2, bnd2)

    out = mlp_forward(x, H, W, w1, b1, wdw, bdw, w2, b2)
    out = jax.block_until_ready(out)

    ref = mlp_reference(x, H, W, w1, b1, wdw, bdw, w2, b2)
    # Tolerance covers TPU default (bf16-pass) f32 matmul precision differences between
    # the XLA reference dots and the in-kernel MXU dots; typical error is ~1e-5.
    if not jnp.allclose(out, ref, atol=3e-3, rtol=3e-3):
        err = float(jnp.max(jnp.abs(out - ref)))
        raise AssertionError(f"Pallas Mlp output mismatch vs reference (max abs err {err})")

    print("KERNEL_OK")
</pallas_src>

<mosaic_0001>
module attributes {stable_mosaic.version = 11 : i64} {
  func.func @_linear_kernel(%arg0: i32, %arg1: i32, %arg2: i32, %arg3: memref<128x128xf32, #tpu.memory_space<vmem>>, %arg4: memref<128x128xf32, #tpu.memory_space<vmem>>, %arg5: memref<1x128xf32, #tpu.memory_space<vmem>>, %arg6: memref<128x128xf32, #tpu.memory_space<vmem>>, %arg7: memref<128x128xf32, #tpu.memory_space<vmem>>) attributes {dimension_semantics = [#tpu.dimension_semantics<parallel>, #tpu.dimension_semantics<parallel>, #tpu.dimension_semantics<arbitrary>], iteration_bounds = array<i64: 1, 2, 1>, scalar_prefetch = 0 : i64, scratch_operands = 1 : i64, tpu.core_type = #tpu.core_type<tc>, window_params = [{transform_indices = @transform_0, window_bounds = array<i64: 128, 128>}, {transform_indices = @transform_1, window_bounds = array<i64: 128, 128>}, {transform_indices = @transform_2, window_bounds = array<i64: 1, 128>}, {transform_indices = @transform_3, window_bounds = array<i64: 128, 128>}]} {
    %c0_i32 = arith.constant 0 : i32
    %0 = arith.cmpi eq, %arg2, %c0_i32 : i32
    %1 = arith.extui %0 : i1 to i32
    %c0_i32_0 = arith.constant 0 : i32
    %2 = arith.cmpi ne, %1, %c0_i32_0 : i32
    scf.if %2 {
      %cst_10 = arith.constant 0.000000e+00 : f32
      %12 = vector.broadcast %cst_10 : f32 to vector<128x128xf32>
      %c0_11 = arith.constant 0 : index
      %c0_12 = arith.constant 0 : index
      %13 = vector.load %arg7[%c0_11, %c0_12] : memref<128x128xf32, #tpu.memory_space<vmem>>, vector<128x128xf32>
      tpu.vector_store %arg7[%c0_11, %c0_12], %12 {strides = array<i32>} : memref<128x128xf32, #tpu.memory_space<vmem>>, vector<128x128xf32>,
    } else {
    }
    %c0 = arith.constant 0 : index
    %c0_1 = arith.constant 0 : index
    %3 = vector.load %arg7[%c0, %c0_1] : memref<128x128xf32, #tpu.memory_space<vmem>>, vector<128x128xf32>
    %c0_2 = arith.constant 0 : index
    %c0_3 = arith.constant 0 : index
    %4 = vector.load %arg3[%c0_2, %c0_3] : memref<128x128xf32, #tpu.memory_space<vmem>>, vector<128x128xf32>
    %c0_4 = arith.constant 0 : index
    %c0_5 = arith.constant 0 : index
    %5 = vector.load %arg4[%c0_4, %c0_5] : memref<128x128xf32, #tpu.memory_space<vmem>>, vector<128x128xf32>
    %cst = arith.constant dense<0.000000e+00> : vector<128x128xf32>
    %6 = tpu.matmul %4, %5, %cst {dimension_numbers = #tpu.dot_dimension_numbers<[1], [0], [0], [1], [0, 0, 1, 1], [], []>} : vector<128x128xf32>, vector<128x128xf32>, vector<128x128xf32> -> vector<128x128xf32>
    %7 = arith.addf %3, %6 : vector<128x128xf32>
    %c0_6 = arith.constant 0 : index
    %c0_7 = arith.constant 0 : index
    %8 = vector.load %arg7[%c0_6, %c0_7] : memref<128x128xf32, #tpu.memory_space<vmem>>, vector<128x128xf32>
    tpu.vector_store %arg7[%c0_6, %c0_7], %7 {strides = array<i32>} : memref<128x128xf32, #tpu.memory_space<vmem>>, vector<128x128xf32>,
    %c0_i32_8 = arith.constant 0 : i32
    %9 = arith.cmpi eq, %arg2, %c0_i32_8 : i32
    %10 = arith.extui %9 : i1 to i32
    %c0_i32_9 = arith.constant 0 : i32
    %11 = arith.cmpi ne, %10, %c0_i32_9 : i32
    scf.if %11 {
      %c0_10 = arith.constant 0 : index
      %c0_11 = arith.constant 0 : index
      %12 = vector.load %arg7[%c0_10, %c0_11] : memref<128x128xf32, #tpu.memory_space<vmem>>, vector<128x128xf32>
      %c0_12 = arith.constant 0 : index
      %c0_13 = arith.constant 0 : index
      %13 = vector.load %arg5[%c0_12, %c0_13] : memref<1x128xf32, #tpu.memory_space<vmem>>, vector<1x128xf32>
      %14 = vector.broadcast %13 : vector<1x128xf32> to vector<128x128xf32>
      %15 = arith.addf %12, %14 : vector<128x128xf32>
      %c0_14 = arith.constant 0 : index
      %c0_15 = arith.constant 0 : index
      %16 = vector.load %arg6[%c0_14, %c0_15] : memref<128x128xf32, #tpu.memory_space<vmem>>, vector<128x128xf32>
      tpu.vector_store %arg6[%c0_14, %c0_15], %15 {strides = array<i32>} : memref<128x128xf32, #tpu.memory_space<vmem>>, vector<128x128xf32>,
    } else {
    }
    return
  }
  func.func @transform_0(%arg0: i32, %arg1: i32, %arg2: i32) -> (i32, i32) {
    %c0_i32 = arith.constant 0 : i32
    return %arg0, %arg2 : i32, i32
  }
  func.func @transform_1(%arg0: i32, %arg1: i32, %arg2: i32) -> (i32, i32) {
    %c0_i32 = arith.constant 0 : i32
    return %arg2, %arg1 : i32, i32
  }
  func.func @transform_2(%arg0: i32, %arg1: i32, %arg2: i32) -> (i32, i32) {
    %c0_i32 = arith.constant 0 : i32
    %c0_i32_0 = arith.constant 0 : i32
    return %c0_i32, %arg1 : i32, i32
  }
  func.func @transform_3(%arg0: i32, %arg1: i32, %arg2: i32) -> (i32, i32) {
    %c0_i32 = arith.constant 0 : i32
    return %arg0, %arg1 : i32, i32
  }
}

</mosaic_0001>

<llo_original>
// kernel: tpu_custom_call.1
$region0: #{tpu_custom_call.1}
  #allocation0 [shape = 'u32[]', space=smem, size = 0x4, offset = 0x4, fixed_abs, tag = 'smem constant byte address 0x4 - core index']
  #allocation1 [shape = 'u32[144,128]{1,0:T(1,128)}', space=vmem, size = 0x12000, scoped, tag = 'internal scratch']
  #allocation2 [shape = 'f32[128,128]{1,0:T(8,128)}', space=vmem, size = 0x10000, scoped, tag = 'scratch operand']
  %s0 = inlined_call_operand.hbm [shape: f32[128,128], index: 0, kind: input, shape index: {}]
  %s1 = inlined_call_operand.hbm [shape: f32[128,256], index: 1, kind: input, shape index: {}]
  %s2 = inlined_call_operand.vmem [shape: f32[1,256], index: 2, kind: input, shape index: {}]
  %s3 = inlined_call_operand.hbm [shape: f32[128,256], index: 3, kind: output, shape index: {}]
  %s4 = sld [smem:[#allocation0]]
  $region61: #{tpu_custom_call.1} parent=0
    _
  %s6 = ssub.s32 1, %s4
  %s7 = scalar_select 0, %s6, %s4
  $region1: #{tpu_custom_call.1} parent=0
    #allocation3 [shape = 'u8[65536]{0}', space=vmem, size = 0x10000, scoped, tag = 'input window, operand 0, single buffered']
    #allocation4 [shape = 's32[2]{0}', space=sflag, size = 0x8, scoped, tag = 'scoped memory for tpu_custom_call.1']
    #allocation5 [shape = 's32[2]{0}', space=sflag, size = 0x8, scoped, tag = 'scoped memory for tpu_custom_call.1']
    #allocation6 [shape = 'u8[131072]{0}', space=vmem, size = 0x20000, scoped, tag = 'input window, operand 1']
    #allocation7 [shape = 's32[2]{0}', space=sflag, size = 0x8, scoped, tag = 'scoped memory for tpu_custom_call.1']
    #allocation8 [shape = 'u8[131072]{0}', space=vmem, size = 0x20000, scoped, tag = 'output window, operand 0']
    %8 = vsyncpa [#allocation4], 0
    %9 = vsyncpa [#allocation7], 0
    %s10 = scalar_lea.sflag [#allocation7], 1
    %11 = vsyncpa %s10, 0
    %12 = vsyncpa [#allocation5], 0
    %s13 = scalar_lea.sflag [#allocation5], 1
    %14 = vsyncpa %s13, 0
    loop: start=0, step=1, limit=4
    $region2: #{tpu_custom_call.1} parent=1 // loop_pre_header
      _
    $region3: #{tpu_custom_call.1} parent=1 // loop_header
      %s16 = sphi 0, %s20
      %p17 = scmp.ge.s32.totalorder %s16, 4
      %s23 = sphi 0, %s42
      %s24 = sphi 0, %s38
      %s25 = sphi 0, %s34
      %s26 = sphi 0, %s23
      %s27 = sphi 0, %s24
      %s28 = sphi 0, %s25
      %s29 = sphi 0, %s26
      %s30 = sphi 0, %s27
      %s31 = sphi 0, %s28
      %s47 = sphi 0, %s49
      %s50 = sphi 0, %s47
      %s51 = sphi 0, %s50
      %s67 = sphi 0, %s51
      %s75 = sphi 0, %s77
      %s78 = sphi 0, %s75
      %s79 = sphi 0, %s78
      %s95 = sphi 0, %s79
      %s101 = sphi 0, %s103
      %s104 = sphi 0, %s101
      %s105 = sphi 0, %s104
      %s121 = sphi 0, %s105
      %s129 = sphi 0, %s131
      %s132 = sphi 0, %s129
      %s133 = sphi 0, %s132
      %s149 = sphi 0, %s133
    $region4: #{tpu_custom_call.1} parent=1 // loop_header_branch
      %19 = sbr.rel (%p17) target = $region8
    $region5: #{tpu_custom_call.1} parent=1 // loop_body
      %s21 = ssub.s32 %s16, 1
      %s22 = ssub.s32 %s16, 2
      %s32 = sadd.s32 1, %s25
      %p33 = scmp.ge.s32.totalorder %s32, 1
      %s34 = scalar_select %p33, 0, %s32
      %s35 = sadd.s32 1, %s24
      %s36 = scalar_select %p33, %s35, %s24
      %p37 = scmp.ge.s32.totalorder %s36, 2
      %s38 = scalar_select %p37, 0, %s36
      %s39 = sadd.s32 1, %s23
      %s40 = scalar_select %p37, %s39, %s23
      %p41 = scmp.ge.s32.totalorder %s40, 1
      %s42 = scalar_select %p41, 0, %s40
      %s43 = ssub.s32 %s23, %s42
      %s44 = ssub.s32 %s25, %s34
      %s45 = sor.u32 %s43, %s44
      %p46 = scmp.eq.s32.totalorder %s45, 0
      %s48 = sadd.s32 %s47, 1
      %s49 = scalar_select %p46, %s47, %s48
      %p52 = pneg %p46
      %p53 = scmp.eq.s32.totalorder %s16, 1
      %p54 = por %p52, %p53
      %p55 = scmp.ne.s32.totalorder %s47, %s50
      %p56 = scmp.eq.s32.totalorder %s16, 0
      %p57 = por %p55, %p56
      %p58 = scmp.ne.s32.totalorder %s47, %s50
      %p59 = scmp.eq.s32.totalorder %s21, 1
      %p60 = por %p58, %p59
      %p61 = scmp.ne.s32.totalorder %s50, %s51
      %p62 = scmp.eq.s32.totalorder %s21, 0
      %p63 = por %p61, %p62
      %p64 = scmp.ne.s32.totalorder %s50, %s51
      %p65 = scmp.eq.s32.totalorder %s22, 1
      %p66 = por %p64, %p65
      %p68 = scmp.ne.s32.totalorder %s51, %s67
      %p69 = scmp.eq.s32.totalorder %s22, 0
      %p70 = por %p68, %p69
      %s71 = ssub.s32 %s25, %s34
      %s72 = ssub.s32 %s24, %s38
      %s73 = sor.u32 %s71, %s72
      %p74 = scmp.eq.s32.totalorder %s73, 0
      %s76 = sadd.s32 %s75, 1
      %s77 = scalar_select %p74, %s75, %s76
      %p80 = pneg %p74
      %p81 = scmp.eq.s32.totalorder %s16, 1
      %p82 = por %p80, %p81
      %p83 = scmp.ne.s32.totalorder %s75, %s78
      %p84 = scmp.eq.s32.totalorder %s16, 0
      %p85 = por %p83, %p84
      %p86 = scmp.ne.s32.totalorder %s75, %s78
      %p87 = scmp.eq.s32.totalorder %s21, 1
      %p88 = por %p86, %p87
      %p89 = scmp.ne.s32.totalorder %s78, %s79
      %p90 = scmp.eq.s32.totalorder %s21, 0
      %p91 = por %p89, %p90
      %p92 = scmp.ne.s32.totalorder %s78, %s79
      %p93 = scmp.eq.s32.totalorder %s22, 1
      %p94 = por %p92, %p93
      %p96 = scmp.ne.s32.totalorder %s79, %s95
      %p97 = scmp.eq.s32.totalorder %s22, 0
      %p98 = por %p96, %p97
      %s99 = ssub.s32 %s24, %s38
      %p100 = scmp.eq.s32.totalorder %s99, 0
      %s102 = sadd.s32 %s101, 1
      %s103 = scalar_select %p100, %s101, %s102
      %p106 = pneg %p100
      %p107 = scmp.eq.s32.totalorder %s16, 1
      %p108 = por %p106, %p107
      %p109 = scmp.ne.s32.totalorder %s101, %s104
      %p110 = scmp.eq.s32.totalorder %s16, 0
      %p111 = por %p109, %p110
      %p112 = scmp.ne.s32.totalorder %s101, %s104
      %p113 = scmp.eq.s32.totalorder %s21, 1
      %p114 = por %p112, %p113
      %p115 = scmp.ne.s32.totalorder %s104, %s105
      %p116 = scmp.eq.s32.totalorder %s21, 0
      %p117 = por %p115, %p116
      %p118 = scmp.ne.s32.totalorder %s104, %s105
      %p119 = scmp.eq.s32.totalorder %s22, 1
      %p120 = por %p118, %p119
      %p122 = scmp.ne.s32.totalorder %s105, %s121
      %p123 = scmp.eq.s32.totalorder %s22, 0
      %p124 = por %p122, %p123
      %s125 = ssub.s32 %s23, %s42
      %s126 = ssub.s32 %s24, %s38
      %s127 = sor.u32 %s125, %s126
      %p128 = scmp.eq.s32.totalorder %s127, 0
      %s130 = sadd.s32 %s129, 1
      %s131 = scalar_select %p128, %s129, %s130
      %p134 = pneg %p128
      %p135 = scmp.eq.s32.totalorder %s16, 1
      %p136 = por %p134, %p135
      %p137 = scmp.ne.s32.totalorder %s129, %s132
      %p138 = scmp.eq.s32.totalorder %s16, 0
      %p139 = por %p137, %p138
      %p140 = scmp.ne.s32.totalorder %s129, %s132
      %p141 = scmp.eq.s32.totalorder %s21, 1
      %p142 = por %p140, %p141
      %p143 = scmp.ne.s32.totalorder %s132, %s133
      %p144 = scmp.eq.s32.totalorder %s21, 0
      %p145 = por %p143, %p144
      %p146 = scmp.ne.s32.totalorder %s132, %s133
      %p147 = scmp.eq.s32.totalorder %s22, 1
      %p148 = por %p146, %p147
      %p150 = scmp.ne.s32.totalorder %s133, %s149
      %p151 = scmp.eq.s32.totalorder %s22, 0
      %p152 = por %p150, %p151
      %p153 = scmp.le.s32.totalorder 1, %s16
      %p154 = scmp.lt.s32.totalorder %s16, 3
      %p155 = pnand %p153, %p154
      %p156 = pneg %p155
      // Predicated region
      $region9: #{tpu_custom_call.1} parent=5 // pred_check
        _
      $region10: #{tpu_custom_call.1} parent=5 // pred_check_branch
        %158 = sbr.rel (%p155) target = $region12
      $region11: #{tpu_custom_call.1} parent=5 // pred_region
        %s159 = ssub.s32 %s16, 1
        // Predicated region
        $region13: #{tpu_custom_call.1} parent=11 // pred_check
          %p160 = pneg %p63
        $region14: #{tpu_custom_call.1} parent=11 // pred_check_branch
          %162 = sbr.rel (%p160) target = $region16
        $region15: #{tpu_custom_call.1} parent=11 // pred_region
          %s163 = smul.u32 16, %s26
          %s165 = ssub.s32 2048, 2048
          %166 = vsyncadd [#allocation4], %s165
          %s167 = sadd.s32 %s28, %s163
          %s168 = smul.addr %s167, 128
          %s169 = scalar_lea.hbm %s0, %s168
          %s170 = sshll.u32 [#allocation3], 4
          %s171 = int_to_ptr.vmem [resolvable:$true] %s170
          %176 = dma.hbm_to_vmem [thread:$0]  %s169, 2048, %s171, [#allocation4], 128, 128, 8
        $region16: #{tpu_custom_call.1} parent=11 // pred_fallthru
          _
      $region12: #{tpu_custom_call.1} parent=5 // pred_fallthru
        _
      %p177 = scmp.lt.s32.totalorder %s16, 2
      // Predicated region
      $region17: #{tpu_custom_call.1} parent=5 // pred_check
        %p178 = pneg %p177
      $region18: #{tpu_custom_call.1} parent=5 // pred_check_branch
        %180 = sbr.rel (%p178) target = $region20
      $region19: #{tpu_custom_call.1} parent=5 // pred_region
        // Predicated region
        $region21: #{tpu_custom_call.1} parent=19 // pred_check
          %p181 = pneg %p85
        $region22: #{tpu_custom_call.1} parent=19 // pred_check_branch
          %183 = sbr.rel (%p181) target = $region24
        $region23: #{tpu_custom_call.1} parent=19 // pred_region
          %s184 = sand.u32 %s75, 1
          %s185 = scalar_lea.sflag [#allocation7], %s184
          %s186 = sand.u32 %s75, 1
          %s187 = smul.addr %s186, 128
          %s188 = scalar_lea.vmem [#allocation6], %s187
          %s189 = smul.u32 16, %s25
          %s191 = ssub.s32 2048, 2048
          %192 = vsyncadd %s185, %s191
          %s193 = smul.addr %s189, 2
          %s194 = sadd.s32 %s24, %s193
          %s195 = smul.addr %s194, 128
          %s196 = scalar_lea.hbm %s1, %s195
          %s197 = sshll.u32 %s188, 4
          %s198 = int_to_ptr.vmem [resolvable:$true] %s197
          %203 = dma.hbm_to_vmem [thread:$0]  %s196, 2048, %s198, %s185, 256, 128, 8
        $region24: #{tpu_custom_call.1} parent=19 // pred_fallthru
          _
        // Predicated region
        $region25: #{tpu_custom_call.1} parent=19 // pred_check
          %p204 = pneg %p111
        $region26: #{tpu_custom_call.1} parent=19 // pred_check_branch
          %206 = sbr.rel (%p204) target = $region28
        $region27: #{tpu_custom_call.1} parent=19 // pred_region
          %p207 = scmp.lt.s32.totalorder %s24, 1
          %s208 = scalar_select %p207, %s24, 1
          %s209 = scalar_lea.vmem %s2, %s208
        $region28: #{tpu_custom_call.1} parent=19 // pred_fallthru
          _
      $region20: #{tpu_custom_call.1} parent=5 // pred_fallthru
        _
      %p210 = scmp.le.s32.totalorder 1, %s16
      %p211 = scmp.lt.s32.totalorder %s16, 3
      %p212 = pnand %p210, %p211
      %p213 = pneg %p212
      // Predicated region
      $region29: #{tpu_custom_call.1} parent=5 // pred_check
        _
      $region30: #{tpu_custom_call.1} parent=5 // pred_check_branch
        %215 = sbr.rel (%p212) target = $region32
      $region31: #{tpu_custom_call.1} parent=5 // pred_region
        %s216 = ssub.s32 %s16, 1
        // Predicated region
        $region33: #{tpu_custom_call.1} parent=31 // pred_check
          %p217 = pneg %p63
        $region34: #{tpu_custom_call.1} parent=31 // pred_check_branch
          %219 = sbr.rel (%p217) target = $region36
        $region35: #{tpu_custom_call.1} parent=31 // pred_region
          %220 = dma.done [#allocation4], 2048
        $region36: #{tpu_custom_call.1} parent=31 // pred_fallthru
          _
        %s221 = sand.u32 %s78, 1
        %s222 = scalar_lea.sflag [#allocation7], %s221
        %s223 = sand.u32 %s78, 1
        %s224 = smul.addr %s223, 128
        %s225 = scalar_lea.vmem [#allocation6], %s224
        // Predicated region
        $region37: #{tpu_custom_call.1} parent=31 // pred_check
          %p226 = pneg %p91
        $region38: #{tpu_custom_call.1} parent=31 // pred_check_branch
          %228 = sbr.rel (%p226) target = $region40
        $region39: #{tpu_custom_call.1} parent=31 // pred_region
          %229 = dma.done %s222, 2048
        $region40: #{tpu_custom_call.1} parent=31 // pred_fallthru
          _
        %p230 = pneg %p63
        %p231 = pneg %p60
        %s232 = sand.u32 %s78, 1
        %s233 = scalar_lea.sflag [#allocation7], %s232
        %s234 = sand.u32 %s78, 1
        %s235 = smul.addr %s234, 128
        %s236 = scalar_lea.vmem [#allocation6], %s235
        %p237 = pneg %p91
        %p238 = pneg %p88
        %p239 = scmp.lt.s32.totalorder %s27, 1
        %s240 = scalar_select %p239, %s27, 1
        %s241 = scalar_lea.vmem %s2, %s240
        %p242 = pneg %p117
        %p243 = pneg %p114
        %p244 = pneg %p145
        %p245 = pneg %p142
        %s246 = sand.u32 %s132, 1
        %s247 = scalar_lea.sflag [#allocation5], %s246
        %s248 = sand.u32 %s132, 1
        %s249 = smul.addr %s248, 128
        %s250 = scalar_lea.vmem [#allocation8], %s249
        %s251 = smul.u32 16, %s26
        %s252 = smul.u32 16, %s28
        %p253 = scmp.lt.s32.totalorder %s27, 1
        %s254 = scalar_select %p253, %s27, 1
        %s255 = scalar_lea.vmem %s2, %s254
        %s256 = smul.u32 16, %s26
        %p257 = scmp.eq.s32.totalorder %s28, 0
        // Predicated region
        $region41: #{tpu_custom_call.1} parent=31 // pred_check
          %p258 = pneg %p257
        $region42: #{tpu_custom_call.1} parent=31 // pred_check_branch
          %260 = sbr.rel (%p258) target = $region44
        $region43: #{tpu_custom_call.1} parent=31 // pred_region
          %261 = vst [vmem:[#allocation2] sm:$0xff] 0.0
          %262 = vst [vmem:[#allocation2 + $0x8] sm:$0xff] 0.0
          %263 = vst [vmem:[#allocation2 + $0x10] sm:$0xff] 0.0
          %264 = vst [vmem:[#allocation2 + $0x18] sm:$0xff] 0.0
          %265 = vst [vmem:[#allocation2 + $0x20] sm:$0xff] 0.0
          %266 = vst [vmem:[#allocation2 + $0x28] sm:$0xff] 0.0
          %267 = vst [vmem:[#allocation2 + $0x30] sm:$0xff] 0.0
          %268 = vst [vmem:[#allocation2 + $0x38] sm:$0xff] 0.0
          %269 = vst [vmem:[#allocation2 + $0x40] sm:$0xff] 0.0
          %270 = vst [vmem:[#allocation2 + $0x48] sm:$0xff] 0.0
          %271 = vst [vmem:[#allocation2 + $0x50] sm:$0xff] 0.0
          %272 = vst [vmem:[#allocation2 + $0x58] sm:$0xff] 0.0
          %273 = vst [vmem:[#allocation2 + $0x60] sm:$0xff] 0.0
          %274 = vst [vmem:[#allocation2 + $0x68] sm:$0xff] 0.0
          %275 = vst [vmem:[#allocation2 + $0x70] sm:$0xff] 0.0
          %276 = vst [vmem:[#allocation2 + $0x78] sm:$0xff] 0.0
        $region44: #{tpu_custom_call.1} parent=31 // pred_fallthru
          _
        %v277 = vld [vmem:[#allocation2] sm:$0xff]
        %v278 = vld [vmem:[#allocation2 + $0x8] sm:$0xff]
        %v279 = vld [vmem:[#allocation2 + $0x10] sm:$0xff]
        %v280 = vld [vmem:[#allocation2 + $0x18] sm:$0xff]
        %v281 = vld [vmem:[#allocation2 + $0x20] sm:$0xff]
        %v282 = vld [vmem:[#allocation2 + $0x28] sm:$0xff]
        %v283 = vld [vmem:[#allocation2 + $0x30] sm:$0xff]
        %v284 = vld [vmem:[#allocation2 + $0x38] sm:$0xff]
        %v285 = vld [vmem:[#allocation2 + $0x40] sm:$0xff]
        %v286 = vld [vmem:[#allocation2 + $0x48] sm:$0xff]
        %v287 = vld [vmem:[#allocation2 + $0x50] sm:$0xff]
        %v288 = vld [vmem:[#allocation2 + $0x58] sm:$0xff]
        %v289 = vld [vmem:[#allocation2 + $0x60] sm:$0xff]
        %v290 = vld [vmem:[#allocation2 + $0x68] sm:$0xff]
        %v291 = vld [vmem:[#allocation2 + $0x70] sm:$0xff]
        %v292 = vld [vmem:[#allocation2 + $0x78] sm:$0xff]
        %v293 = vld [vmem:[#allocation3] sm:$0xff]
        %v294 = vld [vmem:[#allocation3 + $0x8] sm:$0xff]
        %v295 = vld [vmem:[#allocation3 + $0x10] sm:$0xff]
        %v296 = vld [vmem:[#allocation3 + $0x18] sm:$0xff]
        %v297 = vld [vmem:[#allocation3 + $0x20] sm:$0xff]
        %v298 = vld [vmem:[#allocation3 + $0x28] sm:$0xff]
        %v299 = vld [vmem:[#allocation3 + $0x30] sm:$0xff]
        %v300 = vld [vmem:[#allocation3 + $0x38] sm:$0xff]
        %v301 = vld [vmem:[#allocation3 + $0x40] sm:$0xff]
        %v302 = vld [vmem:[#allocation3 + $0x48] sm:$0xff]
        %v303 = vld [vmem:[#allocation3 + $0x50] sm:$0xff]
        %v304 = vld [vmem:[#allocation3 + $0x58] sm:$0xff]
        %v305 = vld [vmem:[#allocation3 + $0x60] sm:$0xff]
        %v306 = vld [vmem:[#allocation3 + $0x68] sm:$0xff]
        %v307 = vld [vmem:[#allocation3 + $0x70] sm:$0xff]
        %v308 = vld [vmem:[#allocation3 + $0x78] sm:$0xff]
        %v309 = vld [vmem:[%s225] sm:$0xff]
        %v310 = vld [vmem:[%s225 + $0x8] sm:$0xff]
        %v311 = vld [vmem:[%s225 + $0x10] sm:$0xff]
        %v312 = vld [vmem:[%s225 + $0x18] sm:$0xff]
        %v313 = vld [vmem:[%s225 + $0x20] sm:$0xff]
        %v314 = vld [vmem:[%s225 + $0x28] sm:$0xff]
        %v315 = vld [vmem:[%s225 + $0x30] sm:$0xff]
        %v316 = vld [vmem:[%s225 + $0x38] sm:$0xff]
        %v317 = vld [vmem:[%s225 + $0x40] sm:$0xff]
        %v318 = vld [vmem:[%s225 + $0x48] sm:$0xff]
        %v319 = vld [vmem:[%s225 + $0x50] sm:$0xff]
        %v320 = vld [vmem:[%s225 + $0x58] sm:$0xff]
        %v321 = vld [vmem:[%s225 + $0x60] sm:$0xff]
        %v322 = vld [vmem:[%s225 + $0x68] sm:$0xff]
        %v323 = vld [vmem:[%s225 + $0x70] sm:$0xff]
        %v324 = vld [vmem:[%s225 + $0x78] sm:$0xff]
        %325 = vmatprep.subr.mxu0 0.0
        %326 = vmatpush1.msra.mxu0 %v324
        %327 = vmatprep.subr.mxu0 0.0
        %328 = vmatpush1.msra.mxu0 %v323
        %329 = vmatprep.subr.mxu0 0.0
        %330 = vmatpush1.msra.mxu0 %v322
        %331 = vmatprep.subr.mxu0 0.0
        %332 = vmatpush1.msra.mxu0 %v321
        %333 = vmatprep.subr.mxu0 0.0
        %334 = vmatpush1.msra.mxu0 %v320
        %335 = vmatprep.subr.mxu0 0.0
        %336 = vmatpush1.msra.mxu0 %v319
        %337 = vmatprep.subr.mxu0 0.0
        %338 = vmatpush1.msra.mxu0 %v318
        %339 = vmatprep.subr.mxu0 0.0
        %340 = vmatpush1.msra.mxu0 %v317
        %341 = vmatprep.subr.mxu0 0.0
        %342 = vmatpush1.msra.mxu0 %v316
        %343 = vmatprep.subr.mxu0 0.0
        %344 = vmatpush1.msra.mxu0 %v315
        %345 = vmatprep.subr.mxu0 0.0
        %346 = vmatpush1.msra.mxu0 %v314
        %347 = vmatprep.subr.mxu0 0.0
        %348 = vmatpush1.msra.mxu0 %v313
        %349 = vmatprep.subr.mxu0 0.0
        %350 = vmatpush1.msra.mxu0 %v312
        %351 = vmatprep.subr.mxu0 0.0
        %352 = vmatpush1.msra.mxu0 %v311
        %353 = vmatprep.subr.mxu0 0.0
        %354 = vmatpush1.msra.mxu0 %v310
        %355 = vmatprep.subr.mxu0 0.0
        %356 = vmatpush1.msra.mxu0 %v309
        %357 = vmatprep.subr.mxu0 0.0
        %358 = vmatpush2.msra.mxu0 0.0
        %359 = vmatprep.subr.mxu0 0.0
        %360 = vmatpush2.msra.mxu0 0.0
        %361 = vmatprep.subr.mxu0 0.0
        %362 = vmatpush2.msra.mxu0 0.0
        %363 = vmatprep.subr.mxu0 0.0
        %364 = vmatpush2.msra.mxu0 0.0
        %365 = vmatprep.subr.mxu0 0.0
        %366 = vmatpush2.msra.mxu0 0.0
        %367 = vmatprep.subr.mxu0 0.0
        %368 = vmatpush2.msra.mxu0 0.0
        %369 = vmatprep.subr.mxu0 0.0
        %370 = vmatpush2.msra.mxu0 0.0
        %371 = vmatprep.subr.mxu0 0.0
        %372 = vmatpush2.msra.mxu0 0.0
        %373 = vmatprep.subr.mxu0 0.0
        %374 = vmatpush2.msra.mxu0 0.0
        %375 = vmatprep.subr.mxu0 0.0
        %376 = vmatpush2.msra.mxu0 0.0
        %377 = vmatprep.subr.mxu0 0.0
        %378 = vmatpush2.msra.mxu0 0.0
        %379 = vmatprep.subr.mxu0 0.0
        %380 = vmatpush2.msra.mxu0 0.0
        %381 = vmatprep.subr.mxu0 0.0
        %382 = vmatpush2.msra.mxu0 0.0
        %383 = vmatprep.subr.mxu0 0.0
        %384 = vmatpush2.msra.mxu0 0.0
        %385 = vmatprep.subr.mxu0 0.0
        %386 = vmatpush2.msra.mxu0 0.0
        %387 = vmatprep.subr.mxu0 0.0
        %388 = vmatpush2.msra.mxu0 0.0
        %389 = vmatprep.mubr.f32.mxu0 0.0
        %390 = vmatmul.mubr.f32.gmra.mxu0 %v293
        %v391 = vpop.f32.mrf.mxu0
        %v392 = vadd.f32 0.0, %v391
        %v393 = vpop.f32.mrf.mxu0
        %394 = vmatprep.mubr.f32.mxu0 0.0
        %395 = vmatmul.mubr.f32.gmra.mxu0 %v294
        %v396 = vpop.f32.mrf.mxu0
        %v397 = vadd.f32 0.0, %v396
        %v398 = vpop.f32.mrf.mxu0
        %399 = vmatprep.mubr.f32.mxu0 0.0
        %400 = vmatmul.mubr.f32.gmra.mxu0 %v295
        %v401 = vpop.f32.mrf.mxu0
        %v402 = vadd.f32 0.0, %v401
        %v403 = vpop.f32.mrf.mxu0
        %404 = vmatprep.mubr.f32.mxu0 0.0
        %405 = vmatmul.mubr.f32.gmra.mxu0 %v296
        %v406 = vpop.f32.mrf.mxu0
        %v407 = vadd.f32 0.0, %v406
        %v408 = vpop.f32.mrf.mxu0
        %409 = vmatprep.mubr.f32.mxu0 0.0
        %410 = vmatmul.mubr.f32.gmra.mxu0 %v297
        %v411 = vpop.f32.mrf.mxu0
        %v412 = vadd.f32 0.0, %v411
        %v413 = vpop.f32.mrf.mxu0
        %414 = vmatprep.mubr.f32.mxu0 0.0
        %415 = vmatmul.mubr.f32.gmra.mxu0 %v298
        %v416 = vpop.f32.mrf.mxu0
        %v417 = vadd.f32 0.0, %v416
        %v418 = vpop.f32.mrf.mxu0
        %419 = vmatprep.mubr.f32.mxu0 0.0
        %420 = vmatmul.mubr.f32.gmra.mxu0 %v299
        %v421 = vpop.f32.mrf.mxu0
        %v422 = vadd.f32 0.0, %v421
        %v423 = vpop.f32.mrf.mxu0
        %424 = vmatprep.mubr.f32.mxu0 0.0
        %425 = vmatmul.mubr.f32.gmra.mxu0 %v300
        %v426 = vpop.f32.mrf.mxu0
        %v427 = vadd.f32 0.0, %v426
        %v428 = vpop.f32.mrf.mxu0
        %429 = vmatprep.mubr.f32.mxu0 0.0
        %430 = vmatmul.mubr.f32.gmra.mxu0 %v301
        %v431 = vpop.f32.mrf.mxu0
        %v432 = vadd.f32 0.0, %v431
        %v433 = vpop.f32.mrf.mxu0
        %434 = vmatprep.mubr.f32.mxu0 0.0
        %435 = vmatmul.mubr.f32.gmra.mxu0 %v302
        %v436 = vpop.f32.mrf.mxu0
        %v437 = vadd.f32 0.0, %v436
        %v438 = vpop.f32.mrf.mxu0
        %439 = vmatprep.mubr.f32.mxu0 0.0
        %440 = vmatmul.mubr.f32.gmra.mxu0 %v303
        %v441 = vpop.f32.mrf.mxu0
        %v442 = vadd.f32 0.0, %v441
        %v443 = vpop.f32.mrf.mxu0
        %444 = vmatprep.mubr.f32.mxu0 0.0
        %445 = vmatmul.mubr.f32.gmra.mxu0 %v304
        %v446 = vpop.f32.mrf.mxu0
        %v447 = vadd.f32 0.0, %v446
        %v448 = vpop.f32.mrf.mxu0
        %449 = vmatprep.mubr.f32.mxu0 0.0
        %450 = vmatmul.mubr.f32.gmra.mxu0 %v305
        %v451 = vpop.f32.mrf.mxu0
        %v452 = vadd.f32 0.0, %v451
        %v453 = vpop.f32.mrf.mxu0
        %454 = vmatprep.mubr.f32.mxu0 0.0
        %455 = vmatmul.mubr.f32.gmra.mxu0 %v306
        %v456 = vpop.f32.mrf.mxu0
        %v457 = vadd.f32 0.0, %v456
        %v458 = vpop.f32.mrf.mxu0
        %459 = vmatprep.mubr.f32.mxu0 0.0
        %460 = vmatmul.mubr.f32.gmra.mxu0 %v307
        %v461 = vpop.f32.mrf.mxu0
        %v462 = vadd.f32 0.0, %v461
        %v463 = vpop.f32.mrf.mxu0
        %464 = vmatprep.mubr.f32.mxu0 0.0
        %465 = vmatmul.mubr.f32.gmra.mxu0 %v308
        %v466 = vpop.f32.mrf.mxu0
        %v467 = vadd.f32 0.0, %v466
        %v468 = vpop.f32.mrf.mxu0
        %469 = vdwg.mxu0
        %v470 = vadd.f32 %v277, %v392
        %v471 = vadd.f32 %v278, %v397
        %v472 = vadd.f32 %v279, %v402
        %v473 = vadd.f32 %v280, %v407
        %v474 = vadd.f32 %v281, %v412
        %v475 = vadd.f32 %v282, %v417
        %v476 = vadd.f32 %v283, %v422
        %v477 = vadd.f32 %v284, %v427
        %v478 = vadd.f32 %v285, %v432
        %v479 = vadd.f32 %v286, %v437
        %v480 = vadd.f32 %v287, %v442
        %v481 = vadd.f32 %v288, %v447
        %v482 = vadd.f32 %v289, %v452
        %v483 = vadd.f32 %v290, %v457
        %v484 = vadd.f32 %v291, %v462
        %v485 = vadd.f32 %v292, %v467
        %486 = vst [vmem:[#allocation2] sm:$0xff] %v470
        %487 = vst [vmem:[#allocation2 + $0x8] sm:$0xff] %v471
        %488 = vst [vmem:[#allocation2 + $0x10] sm:$0xff] %v472
        %489 = vst [vmem:[#allocation2 + $0x18] sm:$0xff] %v473
        %490 = vst [vmem:[#allocation2 + $0x20] sm:$0xff] %v474
        %491 = vst [vmem:[#allocation2 + $0x28] sm:$0xff] %v475
        %492 = vst [vmem:[#allocation2 + $0x30] sm:$0xff] %v476
        %493 = vst [vmem:[#allocation2 + $0x38] sm:$0xff] %v477
        %494 = vst [vmem:[#allocation2 + $0x40] sm:$0xff] %v478
        %495 = vst [vmem:[#allocation2 + $0x48] sm:$0xff] %v479
        %496 = vst [vmem:[#allocation2 + $0x50] sm:$0xff] %v480
        %497 = vst [vmem:[#allocation2 + $0x58] sm:$0xff] %v481
        %498 = vst [vmem:[#allocation2 + $0x60] sm:$0xff] %v482
        %499 = vst [vmem:[#allocation2 + $0x68] sm:$0xff] %v483
        %500 = vst [vmem:[#allocation2 + $0x70] sm:$0xff] %v484
        %501 = vst [vmem:[#allocation2 + $0x78] sm:$0xff] %v485
        // Predicated region
        $region45: #{tpu_custom_call.1} parent=31 // pred_check
          %p502 = pneg %p257
        $region46: #{tpu_custom_call.1} parent=31 // pred_check_branch
          %504 = sbr.rel (%p502) target = $region48
        $region47: #{tpu_custom_call.1} parent=31 // pred_region
          %v505 = vld [vmem:[#allocation2] sm:$0xff]
          %v506 = vld [vmem:[#allocation2 + $0x8] sm:$0xff]
          %v507 = vld [vmem:[#allocation2 + $0x10] sm:$0xff]
          %v508 = vld [vmem:[#allocation2 + $0x18] sm:$0xff]
          %v509 = vld [vmem:[#allocation2 + $0x20] sm:$0xff]
          %v510 = vld [vmem:[#allocation2 + $0x28] sm:$0xff]
          %v511 = vld [vmem:[#allocation2 + $0x30] sm:$0xff]
          %v512 = vld [vmem:[#allocation2 + $0x38] sm:$0xff]
          %v513 = vld [vmem:[#allocation2 + $0x40] sm:$0xff]
          %v514 = vld [vmem:[#allocation2 + $0x48] sm:$0xff]
          %v515 = vld [vmem:[#allocation2 + $0x50] sm:$0xff]
          %v516 = vld [vmem:[#allocation2 + $0x58] sm:$0xff]
          %v517 = vld [vmem:[#allocation2 + $0x60] sm:$0xff]
          %v518 = vld [vmem:[#allocation2 + $0x68] sm:$0xff]
          %v519 = vld [vmem:[#allocation2 + $0x70] sm:$0xff]
          %v520 = vld [vmem:[#allocation2 + $0x78] sm:$0xff]
          %v521 = vld [vmem:[%s255] sm:$0x1]
          %v523 = vlaneseq
          %v524 = vshrl.u32 %v523, 7
          %v525 = vsub.s32 0, %v524
          %v526 = vrot.slane %v521, %v525
          %v528 = vadd.f32 %v505, %v526
          %v529 = vadd.f32 %v506, %v526
          %v530 = vadd.f32 %v507, %v526
          %v531 = vadd.f32 %v508, %v526
          %v532 = vadd.f32 %v509, %v526
          %v533 = vadd.f32 %v510, %v526
          %v534 = vadd.f32 %v511, %v526
          %v535 = vadd.f32 %v512, %v526
          %v536 = vadd.f32 %v513, %v526
          %v537 = vadd.f32 %v514, %v526
          %v538 = vadd.f32 %v515, %v526
          %v539 = vadd.f32 %v516, %v526
          %v540 = vadd.f32 %v517, %v526
          %v541 = vadd.f32 %v518, %v526
          %v542 = vadd.f32 %v519, %v526
          %v543 = vadd.f32 %v520, %v526
          %544 = vst [vmem:[%s250] sm:$0xff] %v528
          %545 = vst [vmem:[%s250 + $0x8] sm:$0xff] %v529
          %546 = vst [vmem:[%s250 + $0x10] sm:$0xff] %v530
          %547 = vst [vmem:[%s250 + $0x18] sm:$0xff] %v531
          %548 = vst [vmem:[%s250 + $0x20] sm:$0xff] %v532
          %549 = vst [vmem:[%s250 + $0x28] sm:$0xff] %v533
          %550 = vst [vmem:[%s250 + $0x30] sm:$0xff] %v534
          %551 = vst [vmem:[%s250 + $0x38] sm:$0xff] %v535
          %552 = vst [vmem:[%s250 + $0x40] sm:$0xff] %v536
          %553 = vst [vmem:[%s250 + $0x48] sm:$0xff] %v537
          %554 = vst [vmem:[%s250 + $0x50] sm:$0xff] %v538
          %555 = vst [vmem:[%s250 + $0x58] sm:$0xff] %v539
          %556 = vst [vmem:[%s250 + $0x60] sm:$0xff] %v540
          %557 = vst [vmem:[%s250 + $0x68] sm:$0xff] %v541
          %558 = vst [vmem:[%s250 + $0x70] sm:$0xff] %v542
          %559 = vst [vmem:[%s250 + $0x78] sm:$0xff] %v543
        $region48: #{tpu_custom_call.1} parent=31 // pred_fallthru
          _
        %s560 = sand.u32 %s132, 1
        %s561 = scalar_lea.sflag [#allocation5], %s560
        %s562 = sand.u32 %s132, 1
        %s563 = smul.addr %s562, 128
        %s564 = scalar_lea.vmem [#allocation8], %s563
        // Predicated region
        $region49: #{tpu_custom_call.1} parent=31 // pred_check
          %p565 = pneg %p142
        $region50: #{tpu_custom_call.1} parent=31 // pred_check_branch
          %567 = sbr.rel (%p565) target = $region52
        $region51: #{tpu_custom_call.1} parent=31 // pred_region
          %s568 = smul.u32 16, %s26
          %s570 = ssub.s32 2048, 2048
          %571 = vsyncadd %s561, %s570
          %s572 = smul.addr %s568, 2
          %s573 = sadd.s32 %s27, %s572
          %s574 = smul.addr %s573, 128
          %s575 = scalar_lea.hbm %s3, %s574
          %s576 = sshll.u32 %s564, 4
          %s577 = int_to_ptr.vmem [resolvable:$true] %s576
          %582 = dma.vmem_to_hbm [thread:$0]  %s577, 2048, %s575, %s561, 128, 256, 8
        $region52: #{tpu_custom_call.1} parent=31 // pred_fallthru
          _
      $region32: #{tpu_custom_call.1} parent=5 // pred_fallthru
        _
      %p583 = scmp.le.s32.totalorder 2, %s16
      // Predicated region
      $region53: #{tpu_custom_call.1} parent=5 // pred_check
        %p584 = pneg %p583
      $region54: #{tpu_custom_call.1} parent=5 // pred_check_branch
        %586 = sbr.rel (%p584) target = $region56
      $region55: #{tpu_custom_call.1} parent=5 // pred_region
        %s587 = ssub.s32 %s16, 2
        // Predicated region
        $region57: #{tpu_custom_call.1} parent=55 // pred_check
          %p588 = pneg %p148
        $region58: #{tpu_custom_call.1} parent=55 // pred_check_branch
          %590 = sbr.rel (%p588) target = $region60
        $region59: #{tpu_custom_call.1} parent=55 // pred_region
          %s591 = sand.u32 %s133, 1
          %s592 = scalar_lea.sflag [#allocation5], %s591
          %s593 = sand.u32 %s133, 1
          %s594 = smul.addr %s593, 128
          %s595 = scalar_lea.vmem [#allocation8], %s594
          %596 = dma.done %s592, 2048
        $region60: #{tpu_custom_call.1} parent=55 // pred_fallthru
          _
      $region56: #{tpu_custom_call.1} parent=5 // pred_fallthru
        _
    $region6: #{tpu_custom_call.1} parent=1 // loop_footer
      %s20 = sadd.s32 1, %s16
    $region7: #{tpu_custom_call.1} parent=1 // loop_footer_branch
      %15 = sbr.rel target = $region3
    $region8: #{tpu_custom_call.1} parent=1 // loop_exit
      _
    %597 = vsyncpa [#allocation4], 1
    %s598 = scalar_lea.sflag [#allocation4], 1
    %599 = vsyncpa %s598, 1
    %600 = vsyncpa [#allocation7], 1
    %s601 = scalar_lea.sflag [#allocation7], 1
    %602 = vsyncpa %s601, 1
    %603 = vsyncpa [#allocation5], 1
    %s604 = scalar_lea.sflag [#allocation5], 1
    %605 = vsyncpa %s604, 1

</llo_original>
